<compile_context>
chip_gen: v7x
topology: tpu7x:2x2x1
jax: 0.10.0
libtpu: 0.0.40
codegen_flags: <defaults>
</compile_context>

<pallas_src>
import functools

import jax
import jax.numpy as jnp
from jax.experimental import pallas as pl
from jax.experimental.pallas import tpu as pltpu


def _layernorm_kernel(x_ref, scale_ref, bias_ref, o_ref, *, eps, inv_d, two_pass):
    """Normalize a (row_tile, D) block along D.  scale/bias are (1, D) f32."""
    x = x_ref[...].astype(jnp.float32)                       # (tm, D)
    mean = jnp.sum(x, axis=-1, keepdims=True) * inv_d        # (tm, 1)
    if two_pass:
        # Two-pass E[(x-mean)^2]: numerically safest for large-|mean| inputs.
        xc = x - mean
        var = jnp.sum(xc * xc, axis=-1, keepdims=True) * inv_d
    else:
        # Fused single pass: sum(x) and sum(x*x) are independent reductions,
        # removing the mean -> second-reduce dependency chain and one full
        # pass over the (tm, D) f32 temporary.  f32 accumulation; clamp guards
        # against tiny negative values from cancellation.
        sq = jnp.sum(x * x, axis=-1, keepdims=True) * inv_d
        var = jnp.maximum(sq - mean * mean, 0.0)
        xc = x - mean
    # Per-row reciprocal: tm reciprocals + tm*D multiplies instead of tm*D
    # divides.  approx=False keeps exact numerics; switch to approx=True (EUP
    # vrcp) if ~1e-4 relative error is acceptable.
    inv_std = pl.reciprocal(jnp.sqrt(var) + eps, approx=False)
    y = xc * inv_std
    y = y * scale_ref[...] + bias_ref[...]                   # params pre-cast to f32
    o_ref[...] = y.astype(o_ref.dtype)


def _vmem_capacity_bytes():
    """Physical VMEM per TensorCore; conservative fallback if query fails."""
    try:
        return int(pltpu.get_tpu_info().vmem_capacity_bytes)
    except Exception:
        return 64 * 1024 * 1024  # v7x-sized (smallest current generation)


def _row_alignment(itemsize):
    """Sublane packing: 8 rows for 32-bit, 16 for 16-bit, 32 for 8-bit."""
    if itemsize >= 4:
        return 8
    if itemsize == 2:
        return 16
    return 32


def _clamp_row_tile(tile, num_rows, align):
    """Clamp a row tile so the BlockSpec always lowers.

    - num_rows <= align: use a single full-extent block (allowed by the
      (8,128) rule since it equals the full array dim).
    - otherwise: align the tile and keep it <= the largest aligned multiple
      that fits inside num_rows; any remainder becomes a standard ragged last
      block handled by Pallas' boundary clipping.
    """
    if num_rows <= align:
        return int(num_rows)
    tile = max(align, (int(tile) // align) * align)
    tile = min(tile, (num_rows // align) * align)
    return int(tile)


def _choose_row_tile(num_rows, d, itemsize, vmem_cap):
    """Row tile from a bytes-per-block target, capped by a VMEM budget."""
    align = _row_alignment(itemsize)
    # Live VMEM bytes per row: double-buffered input + output blocks (native
    # dtype) plus ~3 f32-wide temporaries inside the body.
    per_row_vmem = d * (4 * itemsize + 3 * 4)
    per_row_in = max(d * itemsize, 1)
    if vmem_cap <= 64 * 1024 * 1024:
        # v7x (64 MiB VMEM): keep the live-block budget tight.
        budget = 20 * 1024 * 1024
    else:
        # v5e / v6e (128 MiB VMEM): plenty of headroom for bigger blocks.
        budget = vmem_cap // 2
    # ~8 MiB of input per grid step keeps the ~0.35us/step overhead <10% of
    # DMA time even at v7x's ~3.2 TB/s; on v5e it is simply hidden under DMA.
    target_in = 8 * 1024 * 1024
    tile_from_budget = budget // max(per_row_vmem, 1)
    tile_from_target = pl.cdiv(target_in, per_row_in)
    tile = min(tile_from_budget, tile_from_target)
    return _clamp_row_tile(max(tile, align), num_rows, align), align


def layer_norm(x, scale, bias, eps=1e-5, row_tile=None, two_pass_variance=False):
    orig_shape = x.shape
    d = orig_shape[-1]
    x2 = x.reshape(-1, d)
    num_rows = x2.shape[0]

    itemsize = jnp.dtype(x.dtype).itemsize
    vmem_cap = _vmem_capacity_bytes()
    auto_tile, align = _choose_row_tile(num_rows, d, itemsize, vmem_cap)
    if row_tile is None:
        row_tile = auto_tile
    else:
        # Validate/round user-supplied tiles to the sublane alignment so the
        # (8,128) BlockSpec constraint is always satisfied.
        row_tile = _clamp_row_tile(pl.cdiv(int(row_tile), align) * align,
                                   num_rows, align)

    # Raise the scoped-VMEM ceiling (default 16/32 MiB) while staying well
    # under physical VMEM on every generation.
    vmem_limit = int(min(vmem_cap * 3 // 4, 100 * 1024 * 1024))

    # Large-D guard: even the minimum-height block must fit the raised limit
    # (a D that fits v6e's 128 MiB can still overflow v7x's 64 MiB).
    # TODO(synk): add a D-chunked reduction path for emb_dim too large for VMEM.
    block_bytes = row_tile * d * (4 * itemsize + 3 * 4) + 2 * d * 4
    if block_bytes > vmem_limit:
        raise ValueError(
            f"LayerNorm block ({row_tile} rows x {d} features, ~{block_bytes >> 20} "
            f"MiB live) exceeds the VMEM limit ({vmem_limit >> 20} MiB) on this "
            "TPU; emb_dim is too large for the single-block-per-row kernel.")

    # Hoist parameter casts out of the grid loop: cast to f32 once in the
    # wrapper; the (1, D) blocks use a constant index_map so they stay resident.
    scale2 = scale.reshape(1, d).astype(jnp.float32)
    bias2 = bias.reshape(1, d).astype(jnp.float32)

    kernel = functools.partial(_layernorm_kernel, eps=float(eps), inv_d=1.0 / d,
                               two_pass=two_pass_variance)

    # No padding and no output slicing: grid covers the rows with cdiv and the
    # ragged last block is clipped by Pallas (out-of-range reads are row-local
    # garbage whose writes are dropped), so HBM traffic is exactly 1R + 1W of x.
    grid = (pl.cdiv(num_rows, row_tile),)

    # NOTE: for best store efficiency D should be a multiple of 128 (lane-dense
    # vst); smaller D still runs correctly but uses masked partial stores.
    out = pl.pallas_call(
        kernel,
        out_shape=jax.ShapeDtypeStruct((num_rows, d), x.dtype),
        grid_spec=pltpu.PrefetchScalarGridSpec(
            num_scalar_prefetch=0,
            grid=grid,
            in_specs=[
                pl.BlockSpec((row_tile, d), lambda i: (i, 0)),
                pl.BlockSpec((1, d), lambda i: (0, 0)),
                pl.BlockSpec((1, d), lambda i: (0, 0)),
            ],
            out_specs=pl.BlockSpec((row_tile, d), lambda i: (i, 0)),
        ),
        compiler_params=pltpu.CompilerParams(
            # Row blocks are fully independent: lets the grid shard across both
            # TensorCores on v7x (no-op on single-TC v5e/v6e).  If profiling
            # shows one v7x TC idle, switch to pltpu.CORE_PARALLEL.
            dimension_semantics=("parallel",),
            vmem_limit_bytes=vmem_limit,
        ),
    )(x2, scale2, bias2)

    return out.reshape(orig_shape)


def layer_norm_ref(x, scale, bias, eps=1e-5):
    xf = x.astype(jnp.float32)
    mean = jnp.mean(xf, axis=-1, keepdims=True)
    var = jnp.mean((xf - mean) ** 2, axis=-1, keepdims=True)
    y = (xf - mean) / (jnp.sqrt(var) + eps)   # eps on std, matching the module
    y = y * scale.astype(jnp.float32) + bias.astype(jnp.float32)
    return y.astype(x.dtype)


if __name__ == "__main__":
    key = jax.random.PRNGKey(0)
    k_x, k_x2, k_s, k_b = jax.random.split(key, 4)

    # emb_dim=128 (the module docstring's example size) keeps the lane dim dense.
    batch, seq, emb_dim = 2, 8, 128
    x = jax.random.normal(k_x, (batch, seq, emb_dim), dtype=jnp.float32)

    # Module-faithful parameter init: torch.ones / torch.zeros.
    scale = jnp.ones((emb_dim,), dtype=jnp.float32)
    bias = jnp.zeros((emb_dim,), dtype=jnp.float32)

    out = jax.block_until_ready(layer_norm(x, scale, bias))
    ref = layer_norm_ref(x, scale, bias)
    assert out.shape == x.shape
    assert jnp.allclose(out, ref, atol=2e-5, rtol=2e-5), "mismatch (default params)"

    # Second check: non-trivial scale/bias and a row count (3*5=15) that is NOT
    # a multiple of the row tile -> exercises the ragged-last-block path.
    x_odd = jax.random.normal(k_x2, (3, 5, emb_dim), dtype=jnp.float32)
    scale_r = 1.0 + 0.1 * jax.random.normal(k_s, (emb_dim,), dtype=jnp.float32)
    bias_r = 0.1 * jax.random.normal(k_b, (emb_dim,), dtype=jnp.float32)

    out2 = jax.block_until_ready(layer_norm(x_odd, scale_r, bias_r))
    ref2 = layer_norm_ref(x_odd, scale_r, bias_r)
    assert out2.shape == x_odd.shape
    assert jnp.allclose(out2, ref2, atol=2e-5, rtol=2e-5), "mismatch (ragged/affine)"

    # Third check: two-pass variance flag and an explicit (rounded) row tile.
    out3 = jax.block_until_ready(
        layer_norm(x_odd, scale_r, bias_r, row_tile=8, two_pass_variance=True))
    assert jnp.allclose(out3, ref2, atol=2e-5, rtol=2e-5), "mismatch (two-pass)"

    print("KERNEL_OK")
</pallas_src>

<mosaic_0001>
module attributes {stable_mosaic.version = 11 : i64} {
  func.func @_layernorm_kernel(%arg0: i32, %arg1: memref<16x128xf32, #tpu.memory_space<vmem>>, %arg2: memref<1x128xf32, #tpu.memory_space<vmem>>, %arg3: memref<1x128xf32, #tpu.memory_space<vmem>>, %arg4: memref<16x128xf32, #tpu.memory_space<vmem>>) attributes {dimension_semantics = [#tpu.dimension_semantics<parallel>], iteration_bounds = array<i64: 1>, scalar_prefetch = 0 : i64, scratch_operands = 0 : i64, tpu.core_type = #tpu.core_type<tc>, window_params = [{transform_indices = @transform_0, window_bounds = array<i64: 16, 128>}, {pipeline_mode = #tpu.pipeline_mode<synchronous>, transform_indices = @transform_1, window_bounds = array<i64: 1, 128>}, {pipeline_mode = #tpu.pipeline_mode<synchronous>, transform_indices = @transform_2, window_bounds = array<i64: 1, 128>}, {transform_indices = @transform_3, window_bounds = array<i64: 16, 128>}]} {
    %c0 = arith.constant 0 : index
    %c0_0 = arith.constant 0 : index
    %0 = vector.load %arg1[%c0, %c0_0] : memref<16x128xf32, #tpu.memory_space<vmem>>, vector<16x128xf32>
    %cst = arith.constant dense<0.000000e+00> : vector<16xf32>
    %1 = vector.multi_reduction <add>, %0, %cst [1] : vector<16x128xf32> to vector<16xf32>
    %2 = vector.shape_cast %1 : vector<16xf32> to vector<16x1xf32>
    %cst_1 = arith.constant 7.812500e-03 : f32
    %3 = vector.broadcast %cst_1 : f32 to vector<16x1xf32>
    %4 = arith.mulf %2, %3 : vector<16x1xf32>
    %5 = arith.mulf %0, %0 : vector<16x128xf32>
    %cst_2 = arith.constant dense<0.000000e+00> : vector<16xf32>
    %6 = vector.multi_reduction <add>, %5, %cst_2 [1] : vector<16x128xf32> to vector<16xf32>
    %7 = vector.shape_cast %6 : vector<16xf32> to vector<16x1xf32>
    %cst_3 = arith.constant 7.812500e-03 : f32
    %8 = vector.broadcast %cst_3 : f32 to vector<16x1xf32>
    %9 = arith.mulf %7, %8 : vector<16x1xf32>
    %10 = arith.mulf %4, %4 : vector<16x1xf32>
    %11 = arith.subf %9, %10 : vector<16x1xf32>
    %cst_4 = arith.constant 0.000000e+00 : f32
    %12 = vector.broadcast %cst_4 : f32 to vector<16x1xf32>
    %13 = arith.maximumf %11, %12 : vector<16x1xf32>
    %14 = vector.broadcast %4 : vector<16x1xf32> to vector<16x128xf32>
    %15 = arith.subf %0, %14 : vector<16x128xf32>
    %16 = math.sqrt %13 : vector<16x1xf32>
    %cst_5 = arith.constant 9.99999974E-6 : f32
    %17 = vector.broadcast %cst_5 : f32 to vector<16x1xf32>
    %18 = arith.addf %16, %17 : vector<16x1xf32>
    %19 = tpu.reciprocal %18 : vector<16x1xf32> -> vector<16x1xf32>
    %20 = vector.broadcast %19 : vector<16x1xf32> to vector<16x128xf32>
    %21 = arith.mulf %15, %20 : vector<16x128xf32>
    %c0_6 = arith.constant 0 : index
    %c0_7 = arith.constant 0 : index
    %22 = vector.load %arg2[%c0_6, %c0_7] : memref<1x128xf32, #tpu.memory_space<vmem>>, vector<1x128xf32>
    %23 = vector.broadcast %22 : vector<1x128xf32> to vector<16x128xf32>
    %24 = arith.mulf %21, %23 : vector<16x128xf32>
    %c0_8 = arith.constant 0 : index
    %c0_9 = arith.constant 0 : index
    %25 = vector.load %arg3[%c0_8, %c0_9] : memref<1x128xf32, #tpu.memory_space<vmem>>, vector<1x128xf32>
    %26 = vector.broadcast %25 : vector<1x128xf32> to vector<16x128xf32>
    %27 = arith.addf %24, %26 : vector<16x128xf32>
    %c0_10 = arith.constant 0 : index
    %c0_11 = arith.constant 0 : index
    %28 = vector.load %arg4[%c0_10, %c0_11] : memref<16x128xf32, #tpu.memory_space<vmem>>, vector<16x128xf32>
    tpu.vector_store %arg4[%c0_10, %c0_11], %27 {strides = array<i32>} : memref<16x128xf32, #tpu.memory_space<vmem>>, vector<16x128xf32>,
    return
  }
  func.func @transform_0(%arg0: i32) -> (i32, i32) {
    %c0_i32 = arith.constant 0 : i32
    %c0_i32_0 = arith.constant 0 : i32
    return %arg0, %c0_i32 : i32, i32
  }
  func.func @transform_1(%arg0: i32) -> (i32, i32) {
    %c0_i32 = arith.constant 0 : i32
    %c0_i32_0 = arith.constant 0 : i32
    %c0_i32_1 = arith.constant 0 : i32
    return %c0_i32, %c0_i32_0 : i32, i32
  }
  func.func @transform_2(%arg0: i32) -> (i32, i32) {
    %c0_i32 = arith.constant 0 : i32
    %c0_i32_0 = arith.constant 0 : i32
    %c0_i32_1 = arith.constant 0 : i32
    return %c0_i32, %c0_i32_0 : i32, i32
  }
  func.func @transform_3(%arg0: i32) -> (i32, i32) {
    %c0_i32 = arith.constant 0 : i32
    %c0_i32_0 = arith.constant 0 : i32
    return %arg0, %c0_i32 : i32, i32
  }
}

</mosaic_0001>

<llo_original>
// kernel: tpu_custom_call.1
$region0: #{tpu_custom_call.1}
  #allocation0 [shape = 'u32[]', space=smem, size = 0x4, offset = 0x4, fixed_abs, tag = 'smem constant byte address 0x4 - core index']
  #allocation1 [shape = 'u32[144,128]{1,0:T(1,128)}', space=vmem, size = 0x12000, scoped, tag = 'internal scratch']
  %s0 = inlined_call_operand.hbm [shape: f32[16,128], index: 0, kind: input, shape index: {}]
  %s1 = inlined_call_operand.vmem [shape: f32[1,128], index: 1, kind: input, shape index: {}]
  %s2 = inlined_call_operand.vmem [shape: f32[1,128], index: 2, kind: input, shape index: {}]
  %s3 = inlined_call_operand.hbm [shape: f32[16,128], index: 3, kind: output, shape index: {}]
  %s4 = sld [smem:[#allocation0]]
  $region26: #{tpu_custom_call.1} parent=0
    _
  %s6 = ssub.s32 1, %s4
  %s7 = scalar_select 0, %s6, %s4
  $region1: #{tpu_custom_call.1} parent=0
    #allocation2 [shape = 'u8[8192]{0}', space=vmem, size = 0x2000, scoped, tag = 'input window, operand 0, single buffered']
    #allocation3 [shape = 's32[1]{0}', space=sflag, size = 0x4, scoped, tag = 'scoped memory for tpu_custom_call.1']
    #allocation4 [shape = 's32[1]{0}', space=sflag, size = 0x4, scoped, tag = 'scoped memory for tpu_custom_call.1']
    #allocation5 [shape = 'u8[8192]{0}', space=vmem, size = 0x2000, scoped, tag = 'output window, operand 0, single buffered']
    %8 = vsyncpa [#allocation3], 0
    %9 = vsyncpa [#allocation4], 0
    // Predicated region
    $region2: #{tpu_custom_call.1} parent=1 // pred_check
      _
    $region3: #{tpu_custom_call.1} parent=1 // pred_check_branch
      %11 = sbr.rel (0) target = $region5
    $region4: #{tpu_custom_call.1} parent=1 // pred_region
      %s13 = ssub.s32 256, 256
      %14 = vsyncadd [#allocation3], %s13
      %s15 = sshll.u32 [#allocation2], 4
      %s16 = int_to_ptr.vmem [resolvable:$true] %s15
      %21 = dma.hbm_to_vmem [thread:$0]  %s0, 256, %s16, [#allocation3], 128, 128, 8
    $region5: #{tpu_custom_call.1} parent=1 // pred_fallthru
      _
    // Predicated region
    $region6: #{tpu_custom_call.1} parent=1 // pred_check
      _
    $region7: #{tpu_custom_call.1} parent=1 // pred_check_branch
      %23 = sbr.rel (0) target = $region9
    $region8: #{tpu_custom_call.1} parent=1 // pred_region
      _
    $region9: #{tpu_custom_call.1} parent=1 // pred_fallthru
      _
    // Predicated region
    $region10: #{tpu_custom_call.1} parent=1 // pred_check
      _
    $region11: #{tpu_custom_call.1} parent=1 // pred_check_branch
      %25 = sbr.rel (0) target = $region13
    $region12: #{tpu_custom_call.1} parent=1 // pred_region
      _
    $region13: #{tpu_custom_call.1} parent=1 // pred_fallthru
      _
    // Predicated region
    $region14: #{tpu_custom_call.1} parent=1 // pred_check
      _
    $region15: #{tpu_custom_call.1} parent=1 // pred_check_branch
      %27 = sbr.rel (0) target = $region17
    $region16: #{tpu_custom_call.1} parent=1 // pred_region
      %28 = dma.done [#allocation3], 256
    $region17: #{tpu_custom_call.1} parent=1 // pred_fallthru
      _
    %v29 = vld [vmem:[#allocation2] sm:$0xff]
    %v30 = vld [vmem:[#allocation2 + $0x8] sm:$0xff]
    %31 = vadd.xlane.f32.xlu0 %v29
    %v32 = vpop.xlane.xlu0 %31
    %33 = vadd.xlane.f32.xlu0 %v30
    %v34 = vpop.xlane.xlu0 %33
    %v35 = vmul.f32 %v32, 0.0078125
    %v36 = vmul.f32 %v34, 0.0078125
    %v37 = vmul.f32 %v29, %v29
    %v38 = vmul.f32 %v30, %v30
    %39 = vadd.xlane.f32.xlu0 %v37
    %v40 = vpop.xlane.xlu0 %39
    %41 = vadd.xlane.f32.xlu0 %v38
    %v42 = vpop.xlane.xlu0 %41
    %v43 = vmul.f32 %v40, 0.0078125
    %v44 = vmul.f32 %v42, 0.0078125
    %v45 = vmul.f32 %v35, %v35
    %v46 = vmul.f32 %v36, %v36
    %v47 = vsub.f32 %v43, %v45
    %v48 = vsub.f32 %v44, %v46
    %v49 = vmax.f32 %v47, 0.0
    %v50 = vmax.f32 %v48, 0.0
    %v51 = vsub.f32 %v29, %v35
    %v52 = vsub.f32 %v30, %v36
    %v53 = vrsqrt.pop %v49
    %v54 = vmul.f32 %v49, %v53
    %vm55 = vcmp.eq.f32.partialorder %v49, inf
    %v56 = vsel %vm55, %v49, %v54
    %vm57 = vcmp.eq.f32.partialorder %v49, 0.0
    %v58 = vand.u32 %v49, 2147483648
    %v59 = vsel %vm57, %v58, %v56
    %v60 = vrsqrt.pop %v50
    %v61 = vmul.f32 %v50, %v60
    %vm62 = vcmp.eq.f32.partialorder %v50, inf
    %v63 = vsel %vm62, %v50, %v61
    %vm64 = vcmp.eq.f32.partialorder %v50, 0.0
    %v65 = vand.u32 %v50, 2147483648
    %v66 = vsel %vm64, %v65, %v63
    %v67 = vadd.f32 %v59, 1e-05
    %v68 = vadd.f32 %v66, 1e-05
    %v69 = vrcp.pop %v67
    %v70 = vrcp.pop %v68
    %v71 = vmul.f32 %v51, %v69
    %v72 = vmul.f32 %v52, %v70
    %v73 = vld [vmem:[%s1] sm:$0x1]
    %v75 = vlaneseq
    %v76 = vshrl.u32 %v75, 7
    %v77 = vsub.s32 0, %v76
    %v78 = vrot.slane %v73, %v77
    %v80 = vmul.f32 %v71, %v78
    %v81 = vmul.f32 %v72, %v78
    %v82 = vld [vmem:[%s2] sm:$0x1]
    %v84 = vlaneseq
    %v85 = vshrl.u32 %v84, 7
    %v86 = vsub.s32 0, %v85
    %v87 = vrot.slane %v82, %v86
    %v89 = vadd.f32 %v80, %v87
    %v90 = vadd.f32 %v81, %v87
    %91 = vst [vmem:[#allocation5] sm:$0xff] %v89
    %92 = vst [vmem:[#allocation5 + $0x8] sm:$0xff] %v90
    // Predicated region
    $region18: #{tpu_custom_call.1} parent=1 // pred_check
      _
    $region19: #{tpu_custom_call.1} parent=1 // pred_check_branch
      %94 = sbr.rel (0) target = $region21
    $region20: #{tpu_custom_call.1} parent=1 // pred_region
      %s96 = ssub.s32 256, 256
      %97 = vsyncadd [#allocation4], %s96
      %s98 = sshll.u32 [#allocation5], 4
      %s99 = int_to_ptr.vmem [resolvable:$true] %s98
      %104 = dma.vmem_to_hbm [thread:$0]  %s99, 256, %s3, [#allocation4], 128, 128, 8
    $region21: #{tpu_custom_call.1} parent=1 // pred_fallthru
      _
    // Predicated region
    $region22: #{tpu_custom_call.1} parent=1 // pred_check
      _
    $region23: #{tpu_custom_call.1} parent=1 // pred_check_branch
      %106 = sbr.rel (0) target = $region25
    $region24: #{tpu_custom_call.1} parent=1 // pred_region
      %107 = dma.done [#allocation4], 256
    $region25: #{tpu_custom_call.1} parent=1 // pred_fallthru
      _
    %108 = vsyncpa [#allocation3], 1
    %109 = vsyncpa [#allocation4], 1

</llo_original>
